<compile_context>
chip_gen: v5e
topology: v5e:2x2
jax: 0.10.0
libtpu: 0.0.40
codegen_flags: <defaults>
</compile_context>

<pallas_src>
import jax
import jax.numpy as jnp
from jax.experimental import pallas as pl
from jax.experimental.pallas import tpu as pltpu


def _conv1x1_kernel(x_ref, w_ref, b_ref, o_ref):
    # x_ref: (C_in,  HW)   float32
    # w_ref: (C_out, C_in) float32
    # b_ref: (C_out, 1)    float32
    # o_ref: (C_out, HW)   float32
    o_ref[...] = (
        jnp.dot(w_ref[...], x_ref[...], preferred_element_type=jnp.float32)
        + b_ref[...]
    )


def conv_dev1_forward(xs, weight, bias):
    """Pallas implementation of ConvDev1.forward.

    xs:     list whose first element is an NCHW tensor (1, C_in, H, W)
    weight: (C_out, C_in, 1, 1)
    bias:   (C_out,)
    returns (1, C_out, H, W)
    """
    x_nchw = xs[0]
    n, cin, h, w = x_nchw.shape
    assert n == 1, "ConvDev1 spec uses batch 1"
    cout = weight.shape[0]
    hw = h * w

    # Pure reshapes of contiguous buffers -- no transposes, no extra HBM traffic.
    x_flat = x_nchw.reshape(cin, hw).astype(jnp.float32)        # (C_in, HW)
    w_flat = weight.reshape(cout, cin).astype(jnp.float32)      # (C_out, C_in)
    b_col = bias.reshape(cout, 1).astype(jnp.float32)           # (C_out, 1)

    out_flat = pl.pallas_call(
        _conv1x1_kernel,
        out_shape=jax.ShapeDtypeStruct((cout, hw), jnp.float32),
        # Whole (small) arrays are brought into VMEM as single full blocks.
        in_specs=[
            pl.BlockSpec(memory_space=pltpu.MemorySpace.VMEM),
            pl.BlockSpec(memory_space=pltpu.MemorySpace.VMEM),
            pl.BlockSpec(memory_space=pltpu.MemorySpace.VMEM),
        ],
        out_specs=pl.BlockSpec(memory_space=pltpu.MemorySpace.VMEM),
    )(x_flat, w_flat, b_col)

    return out_flat.reshape(1, cout, h, w)


if __name__ == "__main__":
    C_IN, C_OUT, H, W = 192, 64, 14, 14

    key = jax.random.PRNGKey(0)

    # Input consistent with the module's dummy_inputs shape, but randomized so the
    # correctness check is non-trivial.
    x = jax.random.uniform(key, (1, C_IN, H, W), dtype=jnp.float32)

    # Parameters exactly as the PyTorch module defines them: weight = ones, bias = zeros.
    weight = jnp.ones((C_OUT, C_IN, 1, 1), dtype=jnp.float32)
    bias = jnp.zeros((C_OUT,), dtype=jnp.float32)

    out = conv_dev1_forward([x], weight, bias)
    out = jax.block_until_ready(out)

    # Pure-JAX reference: XLA's grouped/1x1 conv.
    ref = jax.lax.conv_general_dilated(
        x, weight, window_strides=(1, 1), padding="VALID",
        dimension_numbers=("NCHW", "OIHW", "NCHW"),
    ) + bias.reshape(1, C_OUT, 1, 1)

    assert out.shape == (1, C_OUT, H, W), out.shape
    assert jnp.allclose(out, ref, atol=1e-4, rtol=1e-5), float(jnp.max(jnp.abs(out - ref)))

    print("KERNEL_OK")
</pallas_src>

<mosaic_0001>
module attributes {stable_mosaic.version = 11 : i64} {
  func.func @_conv1x1_kernel(%arg0: memref<192x196xf32, #tpu.memory_space<vmem>>, %arg1: memref<64x192xf32, #tpu.memory_space<vmem>>, %arg2: memref<64x1xf32, #tpu.memory_space<vmem>>, %arg3: memref<64x196xf32, #tpu.memory_space<vmem>>) attributes {dimension_semantics = [], scalar_prefetch = 0 : i64, scratch_operands = 0 : i64, tpu.core_type = #tpu.core_type<tc>} {
    %c0 = arith.constant 0 : index
    %c0_0 = arith.constant 0 : index
    %0 = vector.load %arg1[%c0, %c0_0] : memref<64x192xf32, #tpu.memory_space<vmem>>, vector<64x192xf32>
    %c0_1 = arith.constant 0 : index
    %c0_2 = arith.constant 0 : index
    %1 = vector.load %arg0[%c0_1, %c0_2] : memref<192x196xf32, #tpu.memory_space<vmem>>, vector<192x196xf32>
    %cst = arith.constant dense<0.000000e+00> : vector<64x196xf32>
    %2 = tpu.matmul %0, %1, %cst {dimension_numbers = #tpu.dot_dimension_numbers<[1], [0], [0], [1], [0, 0, 1, 1], [], []>} : vector<64x192xf32>, vector<192x196xf32>, vector<64x196xf32> -> vector<64x196xf32>
    %c0_3 = arith.constant 0 : index
    %c0_4 = arith.constant 0 : index
    %3 = vector.load %arg2[%c0_3, %c0_4] : memref<64x1xf32, #tpu.memory_space<vmem>>, vector<64x1xf32>
    %4 = vector.broadcast %3 : vector<64x1xf32> to vector<64x196xf32>
    %5 = arith.addf %2, %4 : vector<64x196xf32>
    %c0_5 = arith.constant 0 : index
    %c0_6 = arith.constant 0 : index
    %6 = vector.load %arg3[%c0_5, %c0_6] : memref<64x196xf32, #tpu.memory_space<vmem>>, vector<64x196xf32>
    tpu.vector_store %arg3[%c0_5, %c0_6], %5 {strides = array<i32>} : memref<64x196xf32, #tpu.memory_space<vmem>>, vector<64x196xf32>,
    return
  }
}

</mosaic_0001>

<llo_original>
// kernel: tpu_custom_call.1
$region0: #{tpu_custom_call.1}
  #allocation0 [shape = 'u32[]', space=smem, size = 0x4, offset = 0x4, fixed_abs, tag = 'smem constant byte address 0x4 - core index']
  #allocation1 [shape = 'u32[72,128]{1,0:T(1,128)}', space=vmem, size = 0x9000, scoped, tag = 'internal scratch']
  %s0 = inlined_call_operand.hbm [shape: f32[192,196], index: 0, kind: input, shape index: {}]
  %s1 = inlined_call_operand.hbm [shape: f32[64,192], index: 1, kind: input, shape index: {}]
  %s2 = inlined_call_operand.vmem [shape: f32[64,1], index: 2, kind: input, shape index: {}]
  %s3 = inlined_call_operand.hbm [shape: f32[64,196], index: 3, kind: output, shape index: {}]
  %s4 = sld [smem:[#allocation0]]
  $region30: #{tpu_custom_call.1} parent=0
    _
  %s6 = ssub.s32 1, %s4
  %s7 = scalar_select 0, %s6, %s4
  $region1: #{tpu_custom_call.1} parent=0
    #allocation2 [shape = 'u8[196608]{0}', space=vmem, size = 0x30000, scoped, tag = 'input window, operand 0, single buffered']
    #allocation3 [shape = 's32[1]{0}', space=sflag, size = 0x4, scoped, tag = 'scoped memory for tpu_custom_call.1']
    #allocation4 [shape = 's32[1]{0}', space=sflag, size = 0x4, scoped, tag = 'scoped memory for tpu_custom_call.1']
    #allocation5 [shape = 'u8[65536]{0}', space=vmem, size = 0x10000, scoped, tag = 'input window, operand 1, single buffered']
    #allocation6 [shape = 's32[1]{0}', space=sflag, size = 0x4, scoped, tag = 'scoped memory for tpu_custom_call.1']
    #allocation7 [shape = 'u8[65536]{0}', space=vmem, size = 0x10000, scoped, tag = 'output window, operand 0, single buffered']
    %8 = vsyncpa [#allocation3], 0
    %9 = vsyncpa [#allocation6], 0
    %10 = vsyncpa [#allocation4], 0
    // Predicated region
    $region2: #{tpu_custom_call.1} parent=1 // pred_check
      _
    $region3: #{tpu_custom_call.1} parent=1 // pred_check_branch
      %12 = sbr.rel (0) target = $region5
    $region4: #{tpu_custom_call.1} parent=1 // pred_region
      %14 = vsyncadd [#allocation3], 0
      %s15 = sshll.u32 %s0, 4
      %s16 = int_to_ptr.hbm [resolvable:$true] %s15
      %s17 = sshll.u32 [#allocation2], 4
      %s18 = int_to_ptr.vmem [resolvable:$true] %s17
      %23 = dma.hbm_to_vmem [thread:$0]  %s16, 6144, %s18, [#allocation3], 256, 256, 16
    $region5: #{tpu_custom_call.1} parent=1 // pred_fallthru
      _
    // Predicated region
    $region6: #{tpu_custom_call.1} parent=1 // pred_check
      _
    $region7: #{tpu_custom_call.1} parent=1 // pred_check_branch
      %25 = sbr.rel (0) target = $region9
    $region8: #{tpu_custom_call.1} parent=1 // pred_region
      %27 = vsyncadd [#allocation6], 0
      %s28 = sshll.u32 %s1, 4
      %s29 = int_to_ptr.hbm [resolvable:$true] %s28
      %s30 = sshll.u32 [#allocation5], 4
      %s31 = int_to_ptr.vmem [resolvable:$true] %s30
      %36 = dma.hbm_to_vmem [thread:$0]  %s29, 2048, %s31, [#allocation6], 256, 256, 16
    $region9: #{tpu_custom_call.1} parent=1 // pred_fallthru
      _
    // Predicated region
    $region10: #{tpu_custom_call.1} parent=1 // pred_check
      _
    $region11: #{tpu_custom_call.1} parent=1 // pred_check_branch
      %38 = sbr.rel (0) target = $region13
    $region12: #{tpu_custom_call.1} parent=1 // pred_region
      _
    $region13: #{tpu_custom_call.1} parent=1 // pred_fallthru
      _
    // Predicated region
    $region14: #{tpu_custom_call.1} parent=1 // pred_check
      _
    $region15: #{tpu_custom_call.1} parent=1 // pred_check_branch
      %40 = sbr.rel (0) target = $region17
    $region16: #{tpu_custom_call.1} parent=1 // pred_region
      %42 = dma.done [#allocation3], 6144
    $region17: #{tpu_custom_call.1} parent=1 // pred_fallthru
      _
    // Predicated region
    $region18: #{tpu_custom_call.1} parent=1 // pred_check
      _
    $region19: #{tpu_custom_call.1} parent=1 // pred_check_branch
      %44 = sbr.rel (0) target = $region21
    $region20: #{tpu_custom_call.1} parent=1 // pred_region
      %46 = dma.done [#allocation6], 2048
    $region21: #{tpu_custom_call.1} parent=1 // pred_fallthru
      _
    %v47 = vld [vmem:[#allocation5] sm:$0xff]
    %v48 = vld [vmem:[#allocation5 + $0x8] sm:$0xff]
    %v49 = vld [vmem:[#allocation5 + $0x10] sm:$0xff]
    %v50 = vld [vmem:[#allocation5 + $0x18] sm:$0xff]
    %v51 = vld [vmem:[#allocation5 + $0x20] sm:$0xff]
    %v52 = vld [vmem:[#allocation5 + $0x28] sm:$0xff]
    %v53 = vld [vmem:[#allocation5 + $0x30] sm:$0xff]
    %v54 = vld [vmem:[#allocation5 + $0x38] sm:$0xff]
    %v55 = vld [vmem:[#allocation5 + $0x40] sm:$0xff]
    %v56 = vld [vmem:[#allocation5 + $0x48] sm:$0xff]
    %v57 = vld [vmem:[#allocation5 + $0x50] sm:$0xff]
    %v58 = vld [vmem:[#allocation5 + $0x58] sm:$0xff]
    %v59 = vld [vmem:[#allocation5 + $0x60] sm:$0xff]
    %v60 = vld [vmem:[#allocation5 + $0x68] sm:$0xff]
    %v61 = vld [vmem:[#allocation5 + $0x70] sm:$0xff]
    %v62 = vld [vmem:[#allocation5 + $0x78] sm:$0xff]
    %v63 = vld [vmem:[#allocation2] sm:$0xff]
    %v64 = vld [vmem:[#allocation2 + $0x8] sm:$0xff]
    %v65 = vld [vmem:[#allocation2 + $0x10] sm:$0xff]
    %v66 = vld [vmem:[#allocation2 + $0x18] sm:$0xff]
    %v67 = vld [vmem:[#allocation2 + $0x20] sm:$0xff]
    %v68 = vld [vmem:[#allocation2 + $0x28] sm:$0xff]
    %v69 = vld [vmem:[#allocation2 + $0x30] sm:$0xff]
    %v70 = vld [vmem:[#allocation2 + $0x38] sm:$0xff]
    %v71 = vld [vmem:[#allocation2 + $0x40] sm:$0xff]
    %v72 = vld [vmem:[#allocation2 + $0x48] sm:$0xff]
    %v73 = vld [vmem:[#allocation2 + $0x50] sm:$0xff]
    %v74 = vld [vmem:[#allocation2 + $0x58] sm:$0xff]
    %v75 = vld [vmem:[#allocation2 + $0x60] sm:$0xff]
    %v76 = vld [vmem:[#allocation2 + $0x68] sm:$0xff]
    %v77 = vld [vmem:[#allocation2 + $0x70] sm:$0xff]
    %v78 = vld [vmem:[#allocation2 + $0x78] sm:$0xff]
    %v79 = vld [vmem:[#allocation2 + $0x80] sm:$0xff]
    %v80 = vld [vmem:[#allocation2 + $0x88] sm:$0xff]
    %v81 = vld [vmem:[#allocation2 + $0x90] sm:$0xff]
    %v82 = vld [vmem:[#allocation2 + $0x98] sm:$0xff]
    %v83 = vld [vmem:[#allocation2 + $0xa0] sm:$0xff]
    %v84 = vld [vmem:[#allocation2 + $0xa8] sm:$0xff]
    %v85 = vld [vmem:[#allocation2 + $0xb0] sm:$0xff]
    %v86 = vld [vmem:[#allocation2 + $0xb8] sm:$0xff]
    %v87 = vld [vmem:[#allocation2 + $0xc0] sm:$0xff]
    %v88 = vld [vmem:[#allocation2 + $0xc8] sm:$0xff]
    %v89 = vld [vmem:[#allocation2 + $0xd0] sm:$0xff]
    %v90 = vld [vmem:[#allocation2 + $0xd8] sm:$0xff]
    %v91 = vld [vmem:[#allocation2 + $0xe0] sm:$0xff]
    %v92 = vld [vmem:[#allocation2 + $0xe8] sm:$0xff]
    %v93 = vld [vmem:[#allocation2 + $0xf0] sm:$0xff]
    %v94 = vld [vmem:[#allocation2 + $0xf8] sm:$0xff]
    %v95 = vld [vmem:[#allocation2 + $0x100] sm:$0xff]
    %v96 = vld [vmem:[#allocation2 + $0x108] sm:$0xff]
    %v97 = vld [vmem:[#allocation2 + $0x110] sm:$0xff]
    %v98 = vld [vmem:[#allocation2 + $0x118] sm:$0xff]
    %v99 = vld [vmem:[#allocation2 + $0x120] sm:$0xff]
    %v100 = vld [vmem:[#allocation2 + $0x128] sm:$0xff]
    %v101 = vld [vmem:[#allocation2 + $0x130] sm:$0xff]
    %v102 = vld [vmem:[#allocation2 + $0x138] sm:$0xff]
    %v103 = vld [vmem:[#allocation2 + $0x140] sm:$0xff]
    %v104 = vld [vmem:[#allocation2 + $0x148] sm:$0xff]
    %v105 = vld [vmem:[#allocation2 + $0x150] sm:$0xff]
    %v106 = vld [vmem:[#allocation2 + $0x158] sm:$0xff]
    %v107 = vld [vmem:[#allocation2 + $0x160] sm:$0xff]
    %v108 = vld [vmem:[#allocation2 + $0x168] sm:$0xff]
    %v109 = vld [vmem:[#allocation2 + $0x170] sm:$0xff]
    %v110 = vld [vmem:[#allocation2 + $0x178] sm:$0xff]
    %v111 = vld [vmem:[%s2] sm:$0xff]
    %v112 = vld [vmem:[%s2 + $0x8] sm:$0xff]
    %v113 = vld [vmem:[%s2 + $0x10] sm:$0xff]
    %v114 = vld [vmem:[%s2 + $0x18] sm:$0xff]
    %v115 = vld [vmem:[%s2 + $0x20] sm:$0xff]
    %v116 = vld [vmem:[%s2 + $0x28] sm:$0xff]
    %v117 = vld [vmem:[%s2 + $0x30] sm:$0xff]
    %v118 = vld [vmem:[%s2 + $0x38] sm:$0xff]
    %120 = vset.pattern.permute.xlu0 0
    %121 = vperm.xlu0 %120, %v111
    %v122 = vpop.permute.xlu0 %121
    %125 = vset.pattern.permute.xlu0 0
    %126 = vperm.xlu0 %125, %v112
    %v127 = vpop.permute.xlu0 %126
    %130 = vset.pattern.permute.xlu0 0
    %131 = vperm.xlu0 %130, %v113
    %v132 = vpop.permute.xlu0 %131
    %135 = vset.pattern.permute.xlu0 0
    %136 = vperm.xlu0 %135, %v114
    %v137 = vpop.permute.xlu0 %136
    %140 = vset.pattern.permute.xlu0 0
    %141 = vperm.xlu0 %140, %v115
    %v142 = vpop.permute.xlu0 %141
    %145 = vset.pattern.permute.xlu0 0
    %146 = vperm.xlu0 %145, %v116
    %v147 = vpop.permute.xlu0 %146
    %150 = vset.pattern.permute.xlu0 0
    %151 = vperm.xlu0 %150, %v117
    %v152 = vpop.permute.xlu0 %151
    %155 = vset.pattern.permute.xlu0 0
    %156 = vperm.xlu0 %155, %v118
    %v157 = vpop.permute.xlu0 %156
    %vm159 = vcmask 523264
    %v161 = vsel %vm159, %v48, 0
    %v164 = vsel %vm159, %v50, 0
    %v167 = vsel %vm159, %v52, 0
    %v170 = vsel %vm159, %v54, 0
    %v173 = vsel %vm159, %v56, 0
    %v176 = vsel %vm159, %v58, 0
    %v179 = vsel %vm159, %v60, 0
    %v182 = vsel %vm159, %v62, 0
    %184 = vmatpush.msra.mxu0 %v93
    %185 = vmatpush.msra.mxu0 %v91
    %186 = vmatpush.msra.mxu0 %v89
    %187 = vmatpush.msra.mxu0 %v87
    %188 = vmatpush.msra.mxu0 %v85
    %189 = vmatpush.msra.mxu0 %v83
    %190 = vmatpush.msra.mxu0 %v81
    %191 = vmatpush.msra.mxu0 %v79
    %192 = vmatpush.msra.mxu0 %v77
    %193 = vmatpush.msra.mxu0 %v75
    %194 = vmatpush.msra.mxu0 %v73
    %195 = vmatpush.msra.mxu0 %v71
    %196 = vmatpush.msra.mxu0 %v69
    %197 = vmatpush.msra.mxu0 %v67
    %198 = vmatpush.msra.mxu0 %v65
    %199 = vmatpush.msra.mxu0 %v63
    %200 = vmatmul.f32.gmra.mxu0 %v47
    %v201 = vpop.f32.mrf.mxu0
    %v202 = vadd.f32 %v122, %v201
    %203 = vmatmul.f32.gmra.mxu0 %v49
    %v204 = vpop.f32.mrf.mxu0
    %v205 = vadd.f32 %v127, %v204
    %206 = vmatmul.f32.gmra.mxu0 %v51
    %v207 = vpop.f32.mrf.mxu0
    %v208 = vadd.f32 %v132, %v207
    %209 = vmatmul.f32.gmra.mxu0 %v53
    %v210 = vpop.f32.mrf.mxu0
    %v211 = vadd.f32 %v137, %v210
    %212 = vmatmul.f32.gmra.mxu0 %v55
    %v213 = vpop.f32.mrf.mxu0
    %v214 = vadd.f32 %v142, %v213
    %215 = vmatmul.f32.gmra.mxu0 %v57
    %v216 = vpop.f32.mrf.mxu0
    %v217 = vadd.f32 %v147, %v216
    %218 = vmatmul.f32.gmra.mxu0 %v59
    %v219 = vpop.f32.mrf.mxu0
    %v220 = vadd.f32 %v152, %v219
    %221 = vmatmul.f32.gmra.mxu0 %v61
    %v222 = vpop.f32.mrf.mxu0
    %v223 = vadd.f32 %v157, %v222
    %224 = vdwg.mxu0
    %225 = vmatpush.msra.mxu0 0.0
    %226 = vmatpush.msra.mxu0 0.0
    %227 = vmatpush.msra.mxu0 0.0
    %228 = vmatpush.msra.mxu0 0.0
    %229 = vmatpush.msra.mxu0 0.0
    %230 = vmatpush.msra.mxu0 0.0
    %231 = vmatpush.msra.mxu0 0.0
    %232 = vmatpush.msra.mxu0 0.0
    %233 = vmatpush.msra.mxu0 %v109
    %234 = vmatpush.msra.mxu0 %v107
    %235 = vmatpush.msra.mxu0 %v105
    %236 = vmatpush.msra.mxu0 %v103
    %237 = vmatpush.msra.mxu0 %v101
    %238 = vmatpush.msra.mxu0 %v99
    %239 = vmatpush.msra.mxu0 %v97
    %240 = vmatpush.msra.mxu0 %v95
    %241 = vmatmul.f32.gmra.mxu0 %v161
    %v242 = vpop.f32.mrf.mxu0
    %v243 = vadd.f32 %v202, %v242
    %244 = vmatmul.f32.gmra.mxu0 %v164
    %v245 = vpop.f32.mrf.mxu0
    %v246 = vadd.f32 %v205, %v245
    %247 = vmatmul.f32.gmra.mxu0 %v167
    %v248 = vpop.f32.mrf.mxu0
    %v249 = vadd.f32 %v208, %v248
    %250 = vmatmul.f32.gmra.mxu0 %v170
    %v251 = vpop.f32.mrf.mxu0
    %v252 = vadd.f32 %v211, %v251
    %253 = vmatmul.f32.gmra.mxu0 %v173
    %v254 = vpop.f32.mrf.mxu0
    %v255 = vadd.f32 %v214, %v254
    %256 = vmatmul.f32.gmra.mxu0 %v176
    %v257 = vpop.f32.mrf.mxu0
    %v258 = vadd.f32 %v217, %v257
    %259 = vmatmul.f32.gmra.mxu0 %v179
    %v260 = vpop.f32.mrf.mxu0
    %v261 = vadd.f32 %v220, %v260
    %262 = vmatmul.f32.gmra.mxu0 %v182
    %v263 = vpop.f32.mrf.mxu0
    %v264 = vadd.f32 %v223, %v263
    %265 = vdwg.mxu0
    %266 = vmatpush.msra.mxu0 %v94
    %267 = vmatpush.msra.mxu0 %v92
    %268 = vmatpush.msra.mxu0 %v90
    %269 = vmatpush.msra.mxu0 %v88
    %270 = vmatpush.msra.mxu0 %v86
    %271 = vmatpush.msra.mxu0 %v84
    %272 = vmatpush.msra.mxu0 %v82
    %273 = vmatpush.msra.mxu0 %v80
    %274 = vmatpush.msra.mxu0 %v78
    %275 = vmatpush.msra.mxu0 %v76
    %276 = vmatpush.msra.mxu0 %v74
    %277 = vmatpush.msra.mxu0 %v72
    %278 = vmatpush.msra.mxu0 %v70
    %279 = vmatpush.msra.mxu0 %v68
    %280 = vmatpush.msra.mxu0 %v66
    %281 = vmatpush.msra.mxu0 %v64
    %282 = vmatmul.f32.gmra.mxu0 %v47
    %v283 = vpop.f32.mrf.mxu0
    %v284 = vadd.f32 %v122, %v283
    %285 = vmatmul.f32.gmra.mxu0 %v49
    %v286 = vpop.f32.mrf.mxu0
    %v287 = vadd.f32 %v127, %v286
    %288 = vmatmul.f32.gmra.mxu0 %v51
    %v289 = vpop.f32.mrf.mxu0
    %v290 = vadd.f32 %v132, %v289
    %291 = vmatmul.f32.gmra.mxu0 %v53
    %v292 = vpop.f32.mrf.mxu0
    %v293 = vadd.f32 %v137, %v292
    %294 = vmatmul.f32.gmra.mxu0 %v55
    %v295 = vpop.f32.mrf.mxu0
    %v296 = vadd.f32 %v142, %v295
    %297 = vmatmul.f32.gmra.mxu0 %v57
    %v298 = vpop.f32.mrf.mxu0
    %v299 = vadd.f32 %v147, %v298
    %300 = vmatmul.f32.gmra.mxu0 %v59
    %v301 = vpop.f32.mrf.mxu0
    %v302 = vadd.f32 %v152, %v301
    %303 = vmatmul.f32.gmra.mxu0 %v61
    %v304 = vpop.f32.mrf.mxu0
    %v305 = vadd.f32 %v157, %v304
    %306 = vdwg.mxu0
    %307 = vmatpush.msra.mxu0 0.0
    %308 = vmatpush.msra.mxu0 0.0
    %309 = vmatpush.msra.mxu0 0.0
    %310 = vmatpush.msra.mxu0 0.0
    %311 = vmatpush.msra.mxu0 0.0
    %312 = vmatpush.msra.mxu0 0.0
    %313 = vmatpush.msra.mxu0 0.0
    %314 = vmatpush.msra.mxu0 0.0
    %315 = vmatpush.msra.mxu0 %v110
    %316 = vmatpush.msra.mxu0 %v108
    %317 = vmatpush.msra.mxu0 %v106
    %318 = vmatpush.msra.mxu0 %v104
    %319 = vmatpush.msra.mxu0 %v102
    %320 = vmatpush.msra.mxu0 %v100
    %321 = vmatpush.msra.mxu0 %v98
    %322 = vmatpush.msra.mxu0 %v96
    %323 = vmatmul.f32.gmra.mxu0 %v161
    %v324 = vpop.f32.mrf.mxu0
    %v325 = vadd.f32 %v284, %v324
    %326 = vmatmul.f32.gmra.mxu0 %v164
    %v327 = vpop.f32.mrf.mxu0
    %v328 = vadd.f32 %v287, %v327
    %329 = vmatmul.f32.gmra.mxu0 %v167
    %v330 = vpop.f32.mrf.mxu0
    %v331 = vadd.f32 %v290, %v330
    %332 = vmatmul.f32.gmra.mxu0 %v170
    %v333 = vpop.f32.mrf.mxu0
    %v334 = vadd.f32 %v293, %v333
    %335 = vmatmul.f32.gmra.mxu0 %v173
    %v336 = vpop.f32.mrf.mxu0
    %v337 = vadd.f32 %v296, %v336
    %338 = vmatmul.f32.gmra.mxu0 %v176
    %v339 = vpop.f32.mrf.mxu0
    %v340 = vadd.f32 %v299, %v339
    %341 = vmatmul.f32.gmra.mxu0 %v179
    %v342 = vpop.f32.mrf.mxu0
    %v343 = vadd.f32 %v302, %v342
    %344 = vmatmul.f32.gmra.mxu0 %v182
    %v345 = vpop.f32.mrf.mxu0
    %v346 = vadd.f32 %v305, %v345
    %347 = vdwg.mxu0
    %348 = vst [vmem:[#allocation7] sm:$0xff] %v243
    %vm349 = vcmask 556032
    %350 = vst.msk [vmem:[#allocation7 + $0x8] sm:$0xff] %vm349, %v325
    %351 = vst [vmem:[#allocation7 + $0x10] sm:$0xff] %v246
    %352 = vst.msk [vmem:[#allocation7 + $0x18] sm:$0xff] %vm349, %v328
    %353 = vst [vmem:[#allocation7 + $0x20] sm:$0xff] %v249
    %354 = vst.msk [vmem:[#allocation7 + $0x28] sm:$0xff] %vm349, %v331
    %355 = vst [vmem:[#allocation7 + $0x30] sm:$0xff] %v252
    %356 = vst.msk [vmem:[#allocation7 + $0x38] sm:$0xff] %vm349, %v334
    %357 = vst [vmem:[#allocation7 + $0x40] sm:$0xff] %v255
    %358 = vst.msk [vmem:[#allocation7 + $0x48] sm:$0xff] %vm349, %v337
    %359 = vst [vmem:[#allocation7 + $0x50] sm:$0xff] %v258
    %360 = vst.msk [vmem:[#allocation7 + $0x58] sm:$0xff] %vm349, %v340
    %361 = vst [vmem:[#allocation7 + $0x60] sm:$0xff] %v261
    %362 = vst.msk [vmem:[#allocation7 + $0x68] sm:$0xff] %vm349, %v343
    %363 = vst [vmem:[#allocation7 + $0x70] sm:$0xff] %v264
    %364 = vst.msk [vmem:[#allocation7 + $0x78] sm:$0xff] %vm349, %v346
    // Predicated region
    $region22: #{tpu_custom_call.1} parent=1 // pred_check
      _
    $region23: #{tpu_custom_call.1} parent=1 // pred_check_branch
      %366 = sbr.rel (0) target = $region25
    $region24: #{tpu_custom_call.1} parent=1 // pred_region
      %368 = vsyncadd [#allocation4], 0
      %s369 = sshll.u32 [#allocation7], 4
      %s370 = int_to_ptr.vmem [resolvable:$true] %s369
      %s371 = sshll.u32 %s3, 4
      %s372 = int_to_ptr.hbm [resolvable:$true] %s371
      %377 = dma.vmem_to_hbm [thread:$0]  %s370, 2048, %s372, [#allocation4], 256, 256, 16
    $region25: #{tpu_custom_call.1} parent=1 // pred_fallthru
      _
    // Predicated region
    $region26: #{tpu_custom_call.1} parent=1 // pred_check
      _
    $region27: #{tpu_custom_call.1} parent=1 // pred_check_branch
      %379 = sbr.rel (0) target = $region29
    $region28: #{tpu_custom_call.1} parent=1 // pred_region
      %381 = dma.done [#allocation4], 2048
    $region29: #{tpu_custom_call.1} parent=1 // pred_fallthru
      _
    %382 = vsyncpa [#allocation3], 1
    %383 = vsyncpa [#allocation6], 1
    %384 = vsyncpa [#allocation4], 1

</llo_original>
